<compile_context>
chip_gen: v7x
topology: tpu7x:2x2x1
jax: 0.10.0
libtpu: 0.0.40
codegen_flags: <defaults>
</compile_context>

<pallas_src>
import functools

import jax
import jax.numpy as jnp
from jax.experimental import pallas as pl
from jax.experimental.pallas import tpu as pltpu

ALPHA = 2.0                       # module defaults
GAMMA = 1.0
LANES = 128
ACC_ROWS = 256                    # (256, 128) f32 accumulator = 128 KiB (>= 8 vregs deep)
MAX_ROWS_PER_TILE = 8192          # 8192 x 128 f32 = 4 MiB per input tile
VMEM_LIMIT_BYTES = 32 * 1024 * 1024

_ARBITRARY = getattr(pltpu, "ARBITRARY", "arbitrary")
_CORE_PARALLEL = getattr(pltpu, "CORE_PARALLEL", "parallel")


def _bce_with_logits(x, t):
    """F.binary_cross_entropy(sigmoid(x), t), per element, in logits form.

    log(sigmoid(x)) = -softplus(-x); log(1-sigmoid(x)) = -softplus(x).
    The 100-clamp reproduces torch's -100 log clamp.
    """
    sp_pos = jnp.maximum(x, 0.0) + jnp.log(1.0 + jnp.exp(-jnp.abs(x)))  # softplus(x)
    sp_neg = sp_pos - x                                                  # softplus(-x)
    return t * jnp.minimum(sp_neg, 100.0) + (1.0 - t) * jnp.minimum(sp_pos, 100.0)


def _num_tensorcores():
    """Best-effort TC-per-chip query; conservative default of 1 (v5e/v6e)."""
    try:
        info = pltpu.get_tpu_info()
    except Exception:
        return 1
    for attr in ("num_cores", "num_tensorcores", "tensorcores_per_chip",
                 "cores_per_chip"):
        v = getattr(info, attr, None)
        if isinstance(v, int) and v >= 1:
            return v
    return 1


def _bce_sum_kernel(x_ref, t_ref, o_ref, acc_ref, *, rows, rows_per_tile,
                    acc_rows, num_tiles, tiles_per_core, need_mask):
    """grid = (num_cores, tiles_per_core).  Core c handles global tiles
    g = c*tiles_per_core + j, accumulating per-element BCE into a small
    (acc_rows, 128) VMEM accumulator; it writes its partial block on its
    last step."""
    c = pl.program_id(0)                 # core axis (parallel / size 1)
    j = pl.program_id(1)                 # per-core tile axis (reduction)

    @pl.when(j == 0)
    def _():
        acc_ref[...] = jnp.zeros_like(acc_ref)

    g = c * tiles_per_core + j           # true global tile id (may overflow)
    num_chunks = rows_per_tile // acc_rows

    def accumulate_chunk(off):
        if num_chunks == 1:
            x = x_ref[...]
            t = t_ref[...]
        else:
            x = x_ref[pl.ds(off, acc_rows), :]
            t = t_ref[pl.ds(off, acc_rows), :]
        bce = _bce_with_logits(x.astype(jnp.float32), t.astype(jnp.float32))
        if need_mask:
            # Only emitted when the last tile is ragged or a core-split
            # overflow tile exists.  VPU has ample slack in this mem-bound
            # kernel, so the mask costs ~nothing.
            row = (g * rows_per_tile + off
                   + jax.lax.broadcasted_iota(jnp.int32, bce.shape, 0))
            bce = jnp.where(row < rows, bce, 0.0)
        acc_ref[...] += bce

    if num_chunks == 1:
        accumulate_chunk(0)
    else:
        @pl.loop(0, num_chunks)
        def _(k):
            accumulate_chunk(pl.multiple_of(k * acc_rows, acc_rows))

    @pl.when(j == tiles_per_core - 1)
    def _():
        o_ref[...] = acc_ref[...]


def _bce_sum_pallas(x2, t2, rows):
    """Sum of per-element BCE over a (rows, 128) lane-dense layout."""
    rows_per_tile = min(rows, MAX_ROWS_PER_TILE)
    num_tiles = -(-rows // rows_per_tile)
    acc_rows = ACC_ROWS if rows_per_tile % ACC_ROWS == 0 else rows_per_tile

    num_cores = 1
    if num_tiles >= 2:
        num_cores = max(1, min(_num_tensorcores(), 2, num_tiles))
    tiles_per_core = -(-num_tiles // num_cores)

    need_mask = (num_tiles * rows_per_tile != rows
                 or num_cores * tiles_per_core != num_tiles)
    clamp_needed = num_cores * tiles_per_core > num_tiles

    kernel = functools.partial(
        _bce_sum_kernel, rows=rows, rows_per_tile=rows_per_tile,
        acc_rows=acc_rows, num_tiles=num_tiles,
        tiles_per_core=tiles_per_core, need_mask=need_mask)

    def in_map(c, j):
        g = c * tiles_per_core + j
        if clamp_needed:                # overflow tiles re-read a valid (masked) block
            g = jnp.minimum(g, num_tiles - 1)
        return (g, 0)

    sems = (_CORE_PARALLEL if num_cores > 1 else _ARBITRARY, _ARBITRARY)

    partials = pl.pallas_call(
        kernel,
        out_shape=jax.ShapeDtypeStruct((num_cores * acc_rows, LANES), jnp.float32),
        grid_spec=pltpu.PrefetchScalarGridSpec(
            num_scalar_prefetch=0,
            grid=(num_cores, tiles_per_core),
            in_specs=[
                pl.BlockSpec((rows_per_tile, LANES), in_map),
                pl.BlockSpec((rows_per_tile, LANES), in_map),
            ],
            out_specs=pl.BlockSpec((acc_rows, LANES), lambda c, j: (c, 0)),
            scratch_shapes=[pltpu.VMEM((acc_rows, LANES), jnp.float32)],
        ),
        compiler_params=pltpu.CompilerParams(
            dimension_semantics=sems,
            vmem_limit_bytes=VMEM_LIMIT_BYTES),
    )(x2, t2)

    return jnp.sum(partials)            # tiny final reduce in the wrapper


def focal_loss(inputs, targets, alpha=ALPHA, gamma=GAMMA):
    """Pallas implementation of FocalLoss.forward (mean BCE + focal transform)."""
    x = inputs.reshape(-1)
    t = targets.reshape(-1)
    n = int(x.shape[0])

    n_tail = n % LANES
    n_main = n - n_tail

    total = jnp.float32(0.0)
    if n_main:
        rows = n_main // LANES
        if n_tail:
            # Ragged N: kernel runs on the 128-aligned prefix (no jnp.pad of
            # both full tensors); the <128-element tail is a tiny wrapper op.
            x_main, t_main = x[:n_main], t[:n_main]
        else:
            x_main, t_main = x, t       # free reshape; native (narrow) dtypes pass straight in
        total = total + _bce_sum_pallas(x_main.reshape(rows, LANES),
                                        t_main.reshape(rows, LANES), rows)
    if n_tail:
        total = total + jnp.sum(_bce_with_logits(
            x[n_main:].astype(jnp.float32), t[n_main:].astype(jnp.float32)))

    mean_bce = total / jnp.float32(n)
    bce_exp = jnp.exp(-mean_bce)
    # Scalar focal transform (a handful of flops) stays in the wrapper.
    return alpha * (1.0 - bce_exp) ** gamma * mean_bce


def focal_loss_ref(inputs, targets, alpha=ALPHA, gamma=GAMMA):
    """Pure-JAX reference mirroring the PyTorch module."""
    p = jax.nn.sigmoid(inputs.reshape(-1).astype(jnp.float32))
    t = targets.reshape(-1).astype(jnp.float32)
    log_p = jnp.maximum(jnp.log(p), -100.0)
    log_1mp = jnp.maximum(jnp.log(1.0 - p), -100.0)
    bce = jnp.mean(-(t * log_p + (1.0 - t) * log_1mp))
    return alpha * (1.0 - jnp.exp(-bce)) ** gamma * bce


if __name__ == "__main__":
    key = jax.random.PRNGKey(0)
    k1, k2 = jax.random.split(key)
    # NCHW like the PyTorch module would see: (B=2, C=4, H=16, W=16).
    x = jax.random.normal(k1, (2, 4, 16, 16), dtype=jnp.float32)
    t = (jax.random.uniform(k2, (2, 4, 16, 16)) > 0.5).astype(jnp.float32)

    out = focal_loss(x, t)
    jax.block_until_ready(out)

    ref = focal_loss_ref(x, t)
    assert jnp.allclose(out, ref, rtol=1e-5, atol=1e-6), (out, ref)
    print("KERNEL_OK")
</pallas_src>

<mosaic_0001>
module attributes {stable_mosaic.version = 11 : i64} {
  func.func @_bce_sum_kernel(%arg0: i32, %arg1: i32, %arg2: memref<16x128xf32, #tpu.memory_space<vmem>>, %arg3: memref<16x128xf32, #tpu.memory_space<vmem>>, %arg4: memref<16x128xf32, #tpu.memory_space<vmem>>, %arg5: memref<16x128xf32, #tpu.memory_space<vmem>>) attributes {dimension_semantics = [#tpu.dimension_semantics<arbitrary>, #tpu.dimension_semantics<arbitrary>], iteration_bounds = array<i64: 1, 1>, scalar_prefetch = 0 : i64, scratch_operands = 1 : i64, tpu.core_type = #tpu.core_type<tc>, window_params = [{transform_indices = @transform_0, window_bounds = array<i64: 16, 128>}, {transform_indices = @transform_1, window_bounds = array<i64: 16, 128>}, {transform_indices = @transform_2, window_bounds = array<i64: 16, 128>}]} {
    %c0_i32 = arith.constant 0 : i32
    %0 = arith.cmpi eq, %arg1, %c0_i32 : i32
    %1 = arith.extui %0 : i1 to i32
    %c0_i32_0 = arith.constant 0 : i32
    %2 = arith.cmpi ne, %1, %c0_i32_0 : i32
    scf.if %2 {
      %cst_15 = arith.constant 0.000000e+00 : f32
      %31 = vector.broadcast %cst_15 : f32 to vector<16x128xf32>
      %c0_16 = arith.constant 0 : index
      %c0_17 = arith.constant 0 : index
      %32 = vector.load %arg5[%c0_16, %c0_17] : memref<16x128xf32, #tpu.memory_space<vmem>>, vector<16x128xf32>
      tpu.vector_store %arg5[%c0_16, %c0_17], %31 {strides = array<i32>} : memref<16x128xf32, #tpu.memory_space<vmem>>, vector<16x128xf32>,
    } else {
    }
    %c0 = arith.constant 0 : index
    %c0_1 = arith.constant 0 : index
    %3 = vector.load %arg2[%c0, %c0_1] : memref<16x128xf32, #tpu.memory_space<vmem>>, vector<16x128xf32>
    %c0_2 = arith.constant 0 : index
    %c0_3 = arith.constant 0 : index
    %4 = vector.load %arg3[%c0_2, %c0_3] : memref<16x128xf32, #tpu.memory_space<vmem>>, vector<16x128xf32>
    %cst = arith.constant 0.000000e+00 : f32
    %5 = vector.broadcast %cst : f32 to vector<16x128xf32>
    %6 = arith.maximumf %3, %5 : vector<16x128xf32>
    %7 = math.absf %3 : vector<16x128xf32>
    %cst_4 = arith.constant 0.000000e+00 : f32
    %8 = vector.broadcast %cst_4 : f32 to vector<16x128xf32>
    %9 = arith.subf %8, %7 : vector<16x128xf32>
    %10 = math.exp %9 : vector<16x128xf32>
    %cst_5 = arith.constant 1.000000e+00 : f32
    %11 = vector.broadcast %cst_5 : f32 to vector<16x128xf32>
    %12 = arith.addf %11, %10 : vector<16x128xf32>
    %13 = math.log %12 : vector<16x128xf32>
    %14 = arith.addf %6, %13 : vector<16x128xf32>
    %15 = arith.subf %14, %3 : vector<16x128xf32>
    %cst_6 = arith.constant 1.000000e+02 : f32
    %16 = vector.broadcast %cst_6 : f32 to vector<16x128xf32>
    %17 = arith.minimumf %15, %16 : vector<16x128xf32>
    %18 = arith.mulf %4, %17 : vector<16x128xf32>
    %cst_7 = arith.constant 1.000000e+00 : f32
    %19 = vector.broadcast %cst_7 : f32 to vector<16x128xf32>
    %20 = arith.subf %19, %4 : vector<16x128xf32>
    %cst_8 = arith.constant 1.000000e+02 : f32
    %21 = vector.broadcast %cst_8 : f32 to vector<16x128xf32>
    %22 = arith.minimumf %14, %21 : vector<16x128xf32>
    %23 = arith.mulf %20, %22 : vector<16x128xf32>
    %24 = arith.addf %18, %23 : vector<16x128xf32>
    %c0_9 = arith.constant 0 : index
    %c0_10 = arith.constant 0 : index
    %25 = vector.load %arg5[%c0_9, %c0_10] : memref<16x128xf32, #tpu.memory_space<vmem>>, vector<16x128xf32>
    %26 = arith.addf %25, %24 : vector<16x128xf32>
    %c0_11 = arith.constant 0 : index
    %c0_12 = arith.constant 0 : index
    %27 = vector.load %arg5[%c0_11, %c0_12] : memref<16x128xf32, #tpu.memory_space<vmem>>, vector<16x128xf32>
    tpu.vector_store %arg5[%c0_11, %c0_12], %26 {strides = array<i32>} : memref<16x128xf32, #tpu.memory_space<vmem>>, vector<16x128xf32>,
    %c0_i32_13 = arith.constant 0 : i32
    %28 = arith.cmpi eq, %arg1, %c0_i32_13 : i32
    %29 = arith.extui %28 : i1 to i32
    %c0_i32_14 = arith.constant 0 : i32
    %30 = arith.cmpi ne, %29, %c0_i32_14 : i32
    scf.if %30 {
      %c0_15 = arith.constant 0 : index
      %c0_16 = arith.constant 0 : index
      %31 = vector.load %arg5[%c0_15, %c0_16] : memref<16x128xf32, #tpu.memory_space<vmem>>, vector<16x128xf32>
      %c0_17 = arith.constant 0 : index
      %c0_18 = arith.constant 0 : index
      %32 = vector.load %arg4[%c0_17, %c0_18] : memref<16x128xf32, #tpu.memory_space<vmem>>, vector<16x128xf32>
      tpu.vector_store %arg4[%c0_17, %c0_18], %31 {strides = array<i32>} : memref<16x128xf32, #tpu.memory_space<vmem>>, vector<16x128xf32>,
    } else {
    }
    return
  }
  func.func @transform_0(%arg0: i32, %arg1: i32) -> (i32, i32) {
    %c1_i32 = arith.constant 1 : i32
    %0 = arith.muli %arg0, %c1_i32 : i32
    %1 = arith.addi %0, %arg1 : i32
    %c0_i32 = arith.constant 0 : i32
    %c0_i32_0 = arith.constant 0 : i32
    return %1, %c0_i32 : i32, i32
  }
  func.func @transform_1(%arg0: i32, %arg1: i32) -> (i32, i32) {
    %c1_i32 = arith.constant 1 : i32
    %0 = arith.muli %arg0, %c1_i32 : i32
    %1 = arith.addi %0, %arg1 : i32
    %c0_i32 = arith.constant 0 : i32
    %c0_i32_0 = arith.constant 0 : i32
    return %1, %c0_i32 : i32, i32
  }
  func.func @transform_2(%arg0: i32, %arg1: i32) -> (i32, i32) {
    %c0_i32 = arith.constant 0 : i32
    %c0_i32_0 = arith.constant 0 : i32
    return %arg0, %c0_i32 : i32, i32
  }
}

</mosaic_0001>

<llo_original>
// kernel: tpu_custom_call.1
$region0: #{tpu_custom_call.1}
  #allocation0 [shape = 'u32[]', space=smem, size = 0x4, offset = 0x4, fixed_abs, tag = 'smem constant byte address 0x4 - core index']
  #allocation1 [shape = 'u32[144,128]{1,0:T(1,128)}', space=vmem, size = 0x12000, scoped, tag = 'internal scratch']
  #allocation2 [shape = 'f32[16,128]{1,0:T(8,128)}', space=vmem, size = 0x2000, scoped, tag = 'scratch operand']
  %s0 = inlined_call_operand.hbm [shape: f32[16,128], index: 0, kind: input, shape index: {}]
  %s1 = inlined_call_operand.hbm [shape: f32[16,128], index: 1, kind: input, shape index: {}]
  %s2 = inlined_call_operand.hbm [shape: f32[16,128], index: 2, kind: output, shape index: {}]
  %s3 = sld [smem:[#allocation0]]
  $region34: #{tpu_custom_call.1} parent=0
    _
  %s5 = ssub.s32 1, %s3
  %s6 = scalar_select 0, %s5, %s3
  $region1: #{tpu_custom_call.1} parent=0
    #allocation3 [shape = 'u8[8192]{0}', space=vmem, size = 0x2000, scoped, tag = 'input window, operand 0, single buffered']
    #allocation4 [shape = 's32[1]{0}', space=sflag, size = 0x4, scoped, tag = 'scoped memory for tpu_custom_call.1']
    #allocation5 [shape = 's32[1]{0}', space=sflag, size = 0x4, scoped, tag = 'scoped memory for tpu_custom_call.1']
    #allocation6 [shape = 'u8[8192]{0}', space=vmem, size = 0x2000, scoped, tag = 'input window, operand 1, single buffered']
    #allocation7 [shape = 's32[1]{0}', space=sflag, size = 0x4, scoped, tag = 'scoped memory for tpu_custom_call.1']
    #allocation8 [shape = 'u8[8192]{0}', space=vmem, size = 0x2000, scoped, tag = 'output window, operand 0, single buffered']
    %7 = vsyncpa [#allocation4], 0
    %8 = vsyncpa [#allocation7], 0
    %9 = vsyncpa [#allocation5], 0
    // Predicated region
    $region2: #{tpu_custom_call.1} parent=1 // pred_check
      _
    $region3: #{tpu_custom_call.1} parent=1 // pred_check_branch
      %11 = sbr.rel (0) target = $region5
    $region4: #{tpu_custom_call.1} parent=1 // pred_region
      %s12 = sadd.s32 0, 0
      %s13 = smul.u32 2, %s12
      %s15 = ssub.s32 256, 256
      %16 = vsyncadd [#allocation4], %s15
      %s17 = smul.addr %s13, 128
      %s18 = scalar_lea.hbm %s0, %s17
      %s19 = sshll.u32 [#allocation3], 4
      %s20 = int_to_ptr.vmem [resolvable:$true] %s19
      %25 = dma.hbm_to_vmem [thread:$0]  %s18, 256, %s20, [#allocation4], 128, 128, 8
    $region5: #{tpu_custom_call.1} parent=1 // pred_fallthru
      _
    // Predicated region
    $region6: #{tpu_custom_call.1} parent=1 // pred_check
      _
    $region7: #{tpu_custom_call.1} parent=1 // pred_check_branch
      %27 = sbr.rel (0) target = $region9
    $region8: #{tpu_custom_call.1} parent=1 // pred_region
      %s28 = sadd.s32 0, 0
      %s29 = smul.u32 2, %s28
      %s31 = ssub.s32 256, 256
      %32 = vsyncadd [#allocation7], %s31
      %s33 = smul.addr %s29, 128
      %s34 = scalar_lea.hbm %s1, %s33
      %s35 = sshll.u32 [#allocation6], 4
      %s36 = int_to_ptr.vmem [resolvable:$true] %s35
      %41 = dma.hbm_to_vmem [thread:$0]  %s34, 256, %s36, [#allocation7], 128, 128, 8
    $region9: #{tpu_custom_call.1} parent=1 // pred_fallthru
      _
    // Predicated region
    $region10: #{tpu_custom_call.1} parent=1 // pred_check
      _
    $region11: #{tpu_custom_call.1} parent=1 // pred_check_branch
      %43 = sbr.rel (0) target = $region13
    $region12: #{tpu_custom_call.1} parent=1 // pred_region
      %44 = dma.done [#allocation4], 256
    $region13: #{tpu_custom_call.1} parent=1 // pred_fallthru
      _
    // Predicated region
    $region14: #{tpu_custom_call.1} parent=1 // pred_check
      _
    $region15: #{tpu_custom_call.1} parent=1 // pred_check_branch
      %46 = sbr.rel (0) target = $region17
    $region16: #{tpu_custom_call.1} parent=1 // pred_region
      %47 = dma.done [#allocation7], 256
    $region17: #{tpu_custom_call.1} parent=1 // pred_fallthru
      _
    %s48 = sadd.s32 0, 0
    %s49 = smul.u32 2, %s48
    %s50 = sadd.s32 0, 0
    %s51 = smul.u32 2, %s50
    %p52 = scmp.eq.s32.totalorder 0, 0
    // Predicated region
    $region18: #{tpu_custom_call.1} parent=1 // pred_check
      %p53 = pneg %p52
    $region19: #{tpu_custom_call.1} parent=1 // pred_check_branch
      %55 = sbr.rel (%p53) target = $region21
    $region20: #{tpu_custom_call.1} parent=1 // pred_region
      %56 = vst [vmem:[#allocation2] sm:$0xff] 0.0
      %57 = vst [vmem:[#allocation2 + $0x8] sm:$0xff] 0.0
    $region21: #{tpu_custom_call.1} parent=1 // pred_fallthru
      _
    %v58 = vld [vmem:[#allocation3] sm:$0xff]
    %v59 = vld [vmem:[#allocation3 + $0x8] sm:$0xff]
    %v60 = vld [vmem:[#allocation6] sm:$0xff]
    %v61 = vld [vmem:[#allocation6 + $0x8] sm:$0xff]
    %v62 = vmax.f32 %v58, 0.0
    %v63 = vmax.f32 %v59, 0.0
    %v64 = vand.u32 2147483647, %v58
    %v65 = vand.u32 2147483647, %v59
    %v66 = vsub.f32 0.0, %v64
    %v67 = vsub.f32 0.0, %v65
    %v68 = vmul.f32 %v66, 1.442695
    %v69 = vpow.pop %v68
    %v70 = vmul.f32 %v67, 1.442695
    %v71 = vpow.pop %v70
    %v72 = vadd.f32 %v69, 1.0
    %v73 = vadd.f32 %v71, 1.0
    %v74 = vlog2.pop %v72
    %v75 = vmul.f32 %v74, 0.6931472
    %v76 = vlog2.pop %v73
    %v77 = vmul.f32 %v76, 0.6931472
    %v78 = vadd.f32 %v62, %v75
    %v79 = vadd.f32 %v63, %v77
    %v80 = vsub.f32 %v78, %v58
    %v81 = vsub.f32 %v79, %v59
    %v82 = vmin.f32 %v80, 100.0
    %v83 = vmin.f32 %v81, 100.0
    %v84 = vmul.f32 %v60, %v82
    %v85 = vmul.f32 %v61, %v83
    %v86 = vsub.f32 1.0, %v60
    %v87 = vsub.f32 1.0, %v61
    %v88 = vmin.f32 %v78, 100.0
    %v89 = vmin.f32 %v79, 100.0
    %v90 = vmul.f32 %v86, %v88
    %v91 = vmul.f32 %v87, %v89
    %v92 = vadd.f32 %v84, %v90
    %v93 = vadd.f32 %v85, %v91
    %v94 = vld [vmem:[#allocation2] sm:$0xff]
    %v95 = vld [vmem:[#allocation2 + $0x8] sm:$0xff]
    %v96 = vadd.f32 %v94, %v92
    %v97 = vadd.f32 %v95, %v93
    %98 = vst [vmem:[#allocation2] sm:$0xff] %v96
    %99 = vst [vmem:[#allocation2 + $0x8] sm:$0xff] %v97
    // Predicated region
    $region22: #{tpu_custom_call.1} parent=1 // pred_check
      %p100 = pneg %p52
    $region23: #{tpu_custom_call.1} parent=1 // pred_check_branch
      %102 = sbr.rel (%p100) target = $region25
    $region24: #{tpu_custom_call.1} parent=1 // pred_region
      %v103 = vld [vmem:[#allocation2] sm:$0xff]
      %v104 = vld [vmem:[#allocation2 + $0x8] sm:$0xff]
      %105 = vst [vmem:[#allocation8] sm:$0xff] %v103
      %106 = vst [vmem:[#allocation8 + $0x8] sm:$0xff] %v104
    $region25: #{tpu_custom_call.1} parent=1 // pred_fallthru
      _
    // Predicated region
    $region26: #{tpu_custom_call.1} parent=1 // pred_check
      _
    $region27: #{tpu_custom_call.1} parent=1 // pred_check_branch
      %108 = sbr.rel (0) target = $region29
    $region28: #{tpu_custom_call.1} parent=1 // pred_region
      %s110 = ssub.s32 256, 256
      %111 = vsyncadd [#allocation5], %s110
      %s112 = sshll.u32 [#allocation8], 4
      %s113 = int_to_ptr.vmem [resolvable:$true] %s112
      %118 = dma.vmem_to_hbm [thread:$0]  %s113, 256, %s2, [#allocation5], 128, 128, 8
    $region29: #{tpu_custom_call.1} parent=1 // pred_fallthru
      _
    // Predicated region
    $region30: #{tpu_custom_call.1} parent=1 // pred_check
      _
    $region31: #{tpu_custom_call.1} parent=1 // pred_check_branch
      %120 = sbr.rel (0) target = $region33
    $region32: #{tpu_custom_call.1} parent=1 // pred_region
      %121 = dma.done [#allocation5], 256
    $region33: #{tpu_custom_call.1} parent=1 // pred_fallthru
      _
    %122 = vsyncpa [#allocation4], 1
    %123 = vsyncpa [#allocation7], 1
    %124 = vsyncpa [#allocation5], 1

</llo_original>
